<compile_context>
chip_gen: v5e
topology: v5e:2x2
jax: 0.10.0
libtpu: 0.0.40
codegen_flags: <defaults>
</compile_context>

<pallas_src>
import jax
import jax.numpy as jnp
from jax.experimental import pallas as pl
from jax.experimental.pallas import tpu as pltpu


def _rtransform_kernel(r_ref, x_ref, o_ref):
    xv = x_ref[...]                              # (TB, 1, K), x.dtype
    r = r_ref[...].astype(xv.dtype)              # Rs.type_as(x); no-op if same dtype
    # Batched (1,K) @ (K,N) contraction, f32 accumulation on the MXU.
    acc = jnp.einsum("bik,bnk->bin", xv, r,
                     preferred_element_type=jnp.float32)   # (TB, 1, N)
    o_ref[...] = acc.astype(o_ref.dtype)


def _pick_batch_tile(bs, n, k, itemsize, vmem_block_budget=8 * 1024 * 1024):
    """Largest divisor of bs whose Rs block fits the budget; keep >= 2 grid
    steps when bs >= 2 so v7x can engage both TensorCores."""
    per_batch = max(n * k * itemsize, 1)
    cap = max(1, min(bs, vmem_block_budget // per_batch))
    if bs >= 2:
        cap = min(cap, max(1, bs // 2))
    for t in range(cap, 0, -1):
        if bs % t == 0:
            return t
    return 1


@jax.jit
def r_transform_batch(Rs, x):
    """out[b] = Rs[b] @ x[b];  Rs: (bs, N, K), x: (bs, K) -> (bs, N)."""
    bs, n, k = Rs.shape
    bs2, k2 = x.shape
    assert bs == bs2 and k == k2, (Rs.shape, x.shape)

    itemsize = jnp.dtype(Rs.dtype).itemsize
    tb = _pick_batch_tile(bs, n, k, itemsize)
    grid = (bs // tb,)

    x3 = x[:, None, :]                        # (bs, 1, K) -- free reshape
    out_dtype = x.dtype

    cost = pl.CostEstimate(
        flops=2 * bs * n * k,
        transcendentals=0,
        bytes_accessed=(Rs.size * itemsize
                        + x.size * jnp.dtype(x.dtype).itemsize
                        + bs * n * jnp.dtype(out_dtype).itemsize),
    )

    out3 = pl.pallas_call(
        _rtransform_kernel,
        out_shape=jax.ShapeDtypeStruct((bs, 1, n), out_dtype),
        grid=grid,
        in_specs=[
            pl.BlockSpec((tb, n, k), lambda i: (i, 0, 0)),   # Rs batch tile (streamed)
            pl.BlockSpec((tb, 1, k), lambda i: (i, 0, 0)),   # x batch tile (tiny)
        ],
        out_specs=pl.BlockSpec((tb, 1, n), lambda i: (i, 0, 0)),
        compiler_params=pltpu.CompilerParams(
            dimension_semantics=("parallel",),
            vmem_limit_bytes=32 * 1024 * 1024,
        ),
        cost_estimate=cost,
    )(Rs, x3)
    return out3[:, 0, :]                      # (bs, N) -- free reshape

if __name__ == "__main__":
    key = jax.random.PRNGKey(0)
    k_r, k_x = jax.random.split(key)

    BS, N, K = 2, 128, 512                    # shapes fixed by the module docstring
    Rs = jax.random.normal(k_r, (BS, N, K), jnp.float32)
    x = jax.random.normal(k_x, (BS, K), jnp.float32)

    out = r_transform_batch(Rs, x)
    jax.block_until_ready(out)

    assert out.shape == (BS, N)
    ref = jnp.sum(Rs * x[:, None, :], axis=-1)   # plain-JAX torch.bmm reference
    assert jnp.allclose(out, ref, rtol=1e-3, atol=1e-3), \
        float(jnp.max(jnp.abs(out - ref)))
    print("KERNEL_OK")
</pallas_src>

<mosaic_0001>
module attributes {stable_mosaic.version = 11 : i64} {
  func.func @_rtransform_kernel(%arg0: i32, %arg1: memref<1x128x512xf32, #tpu.memory_space<vmem>>, %arg2: memref<1x1x512xf32, #tpu.memory_space<vmem>>, %arg3: memref<1x1x128xf32, #tpu.memory_space<vmem>>) attributes {dimension_semantics = [#tpu.dimension_semantics<parallel>], iteration_bounds = array<i64: 2>, scalar_prefetch = 0 : i64, scratch_operands = 0 : i64, tpu.core_type = #tpu.core_type<tc>, window_params = [{transform_indices = @transform_0, window_bounds = array<i64: 1, 128, 512>}, {transform_indices = @transform_1, window_bounds = array<i64: 1, 1, 512>}, {transform_indices = @transform_2, window_bounds = array<i64: 1, 1, 128>}]} {
    %c0 = arith.constant 0 : index
    %c0_0 = arith.constant 0 : index
    %c0_1 = arith.constant 0 : index
    %0 = vector.load %arg2[%c0, %c0_0, %c0_1] : memref<1x1x512xf32, #tpu.memory_space<vmem>>, vector<1x1x512xf32>
    %c0_2 = arith.constant 0 : index
    %c0_3 = arith.constant 0 : index
    %c0_4 = arith.constant 0 : index
    %1 = vector.load %arg1[%c0_2, %c0_3, %c0_4] : memref<1x128x512xf32, #tpu.memory_space<vmem>>, vector<1x128x512xf32>
    "tpu.trace_start"() <{level = 10 : i32, message = "bik,bnk->bin"}> : () -> ()
    %cst = arith.constant dense<0.000000e+00> : vector<1x1x128xf32>
    %2 = tpu.matmul %0, %1, %cst {dimension_numbers = #tpu.dot_dimension_numbers<[2], [2], [1], [1], [0, 0, 0, 1, 1, 1], [0], [0]>} : vector<1x1x512xf32>, vector<1x128x512xf32>, vector<1x1x128xf32> -> vector<1x1x128xf32>
    "tpu.trace_stop"() : () -> ()
    %c0_5 = arith.constant 0 : index
    %c0_6 = arith.constant 0 : index
    %c0_7 = arith.constant 0 : index
    %3 = vector.load %arg3[%c0_5, %c0_6, %c0_7] : memref<1x1x128xf32, #tpu.memory_space<vmem>>, vector<1x1x128xf32>
    tpu.vector_store %arg3[%c0_5, %c0_6, %c0_7], %2 {strides = array<i32>} : memref<1x1x128xf32, #tpu.memory_space<vmem>>, vector<1x1x128xf32>,
    return
  }
  func.func @transform_0(%arg0: i32) -> (i32, i32, i32) {
    %c0_i32 = arith.constant 0 : i32
    %c0_i32_0 = arith.constant 0 : i32
    %c0_i32_1 = arith.constant 0 : i32
    return %arg0, %c0_i32, %c0_i32_0 : i32, i32, i32
  }
  func.func @transform_1(%arg0: i32) -> (i32, i32, i32) {
    %c0_i32 = arith.constant 0 : i32
    %c0_i32_0 = arith.constant 0 : i32
    %c0_i32_1 = arith.constant 0 : i32
    return %arg0, %c0_i32, %c0_i32_0 : i32, i32, i32
  }
  func.func @transform_2(%arg0: i32) -> (i32, i32, i32) {
    %c0_i32 = arith.constant 0 : i32
    %c0_i32_0 = arith.constant 0 : i32
    %c0_i32_1 = arith.constant 0 : i32
    return %arg0, %c0_i32, %c0_i32_0 : i32, i32, i32
  }
}

</mosaic_0001>

<llo_original>
// kernel: r_transform_batch.1
$region0: #{r_transform_batch.1}
  #allocation0 [shape = 'u32[]', space=smem, size = 0x4, offset = 0x4, fixed_abs, tag = 'smem constant byte address 0x4 - core index']
  #allocation1 [shape = 'u32[72,128]{1,0:T(1,128)}', space=vmem, size = 0x9000, scoped, tag = 'internal scratch']
  %s0 = inlined_call_operand.hbm [shape: f32[2,128,512], index: 0, kind: input, shape index: {}]
  %s1 = inlined_call_operand.vmem [shape: f32[2,1,512], index: 1, kind: input, shape index: {}]
  %s2 = inlined_call_operand.hbm [shape: f32[2,1,128], index: 2, kind: output, shape index: {}]
  %s3 = sld [smem:[#allocation0]]
  $region45: #{r_transform_batch.1} parent=0
    _
  %s5 = ssub.s32 1, %s3
  %s6 = scalar_select 0, %s5, %s3
  $region1: #{r_transform_batch.1} parent=0
    #allocation2 [shape = 'u8[524288]{0}', space=vmem, size = 0x80000, scoped, tag = 'input window, operand 0']
    #allocation3 [shape = 's32[2]{0}', space=sflag, size = 0x8, scoped, tag = 'scoped memory for r_transform_batch.1']
    #allocation4 [shape = 's32[2]{0}', space=sflag, size = 0x8, scoped, tag = 'scoped memory for r_transform_batch.1']
    #allocation5 [shape = 'u8[1024]{0}', space=vmem, size = 0x400, scoped, tag = 'output window, operand 0']
    %7 = vsyncpa [#allocation3], 0
    %s8 = scalar_lea.sflag [#allocation3], 1
    %9 = vsyncpa %s8, 0
    %10 = vsyncpa [#allocation4], 0
    %s11 = scalar_lea.sflag [#allocation4], 1
    %12 = vsyncpa %s11, 0
    loop: start=0, step=1, limit=4
    $region2: #{r_transform_batch.1} parent=1 // loop_pre_header
      _
    $region3: #{r_transform_batch.1} parent=1 // loop_header
      %s14 = sphi 0, %s18
      %p15 = scmp.ge.s32.totalorder %s14, 4
      %s24 = sphi 0, %s26
      %s27 = sphi 0, %s24
      %s28 = sphi 0, %s27
      %s44 = sphi 0, %s28
      %s50 = sphi 0, %s52
      %s53 = sphi 0, %s50
      %s54 = sphi 0, %s53
      %s70 = sphi 0, %s54
      %s76 = sphi 0, %s78
      %s79 = sphi 0, %s76
      %s80 = sphi 0, %s79
      %s96 = sphi 0, %s80
    $region4: #{r_transform_batch.1} parent=1 // loop_header_branch
      %17 = sbr.rel (%p15) target = $region8
    $region5: #{r_transform_batch.1} parent=1 // loop_body
      %s19 = ssub.s32 %s14, 1
      %s20 = ssub.s32 %s14, 2
      %s21 = sadd.s32 %s14, 1
      %s22 = ssub.s32 %s14, %s21
      %p23 = scmp.eq.s32.totalorder %s22, 0
      %s25 = sadd.s32 %s24, 1
      %s26 = scalar_select %p23, %s24, %s25
      %p29 = pneg %p23
      %p30 = scmp.eq.s32.totalorder %s14, 1
      %p31 = por %p29, %p30
      %p32 = scmp.ne.s32.totalorder %s24, %s27
      %p33 = scmp.eq.s32.totalorder %s14, 0
      %p34 = por %p32, %p33
      %p35 = scmp.ne.s32.totalorder %s24, %s27
      %p36 = scmp.eq.s32.totalorder %s19, 1
      %p37 = por %p35, %p36
      %p38 = scmp.ne.s32.totalorder %s27, %s28
      %p39 = scmp.eq.s32.totalorder %s19, 0
      %p40 = por %p38, %p39
      %p41 = scmp.ne.s32.totalorder %s27, %s28
      %p42 = scmp.eq.s32.totalorder %s20, 1
      %p43 = por %p41, %p42
      %p45 = scmp.ne.s32.totalorder %s28, %s44
      %p46 = scmp.eq.s32.totalorder %s20, 0
      %p47 = por %p45, %p46
      %s48 = ssub.s32 %s14, %s21
      %p49 = scmp.eq.s32.totalorder %s48, 0
      %s51 = sadd.s32 %s50, 1
      %s52 = scalar_select %p49, %s50, %s51
      %p55 = pneg %p49
      %p56 = scmp.eq.s32.totalorder %s14, 1
      %p57 = por %p55, %p56
      %p58 = scmp.ne.s32.totalorder %s50, %s53
      %p59 = scmp.eq.s32.totalorder %s14, 0
      %p60 = por %p58, %p59
      %p61 = scmp.ne.s32.totalorder %s50, %s53
      %p62 = scmp.eq.s32.totalorder %s19, 1
      %p63 = por %p61, %p62
      %p64 = scmp.ne.s32.totalorder %s53, %s54
      %p65 = scmp.eq.s32.totalorder %s19, 0
      %p66 = por %p64, %p65
      %p67 = scmp.ne.s32.totalorder %s53, %s54
      %p68 = scmp.eq.s32.totalorder %s20, 1
      %p69 = por %p67, %p68
      %p71 = scmp.ne.s32.totalorder %s54, %s70
      %p72 = scmp.eq.s32.totalorder %s20, 0
      %p73 = por %p71, %p72
      %s74 = ssub.s32 %s14, %s21
      %p75 = scmp.eq.s32.totalorder %s74, 0
      %s77 = sadd.s32 %s76, 1
      %s78 = scalar_select %p75, %s76, %s77
      %p81 = pneg %p75
      %p82 = scmp.eq.s32.totalorder %s14, 1
      %p83 = por %p81, %p82
      %p84 = scmp.ne.s32.totalorder %s76, %s79
      %p85 = scmp.eq.s32.totalorder %s14, 0
      %p86 = por %p84, %p85
      %p87 = scmp.ne.s32.totalorder %s76, %s79
      %p88 = scmp.eq.s32.totalorder %s19, 1
      %p89 = por %p87, %p88
      %p90 = scmp.ne.s32.totalorder %s79, %s80
      %p91 = scmp.eq.s32.totalorder %s19, 0
      %p92 = por %p90, %p91
      %p93 = scmp.ne.s32.totalorder %s79, %s80
      %p94 = scmp.eq.s32.totalorder %s20, 1
      %p95 = por %p93, %p94
      %p97 = scmp.ne.s32.totalorder %s80, %s96
      %p98 = scmp.eq.s32.totalorder %s20, 0
      %p99 = por %p97, %p98
      %p100 = scmp.le.s32.totalorder 1, %s14
      %p101 = scmp.lt.s32.totalorder %s14, 3
      %p102 = pnand %p100, %p101
      %p103 = pneg %p102
      // Predicated region
      $region9: #{r_transform_batch.1} parent=5 // pred_check
        _
      $region10: #{r_transform_batch.1} parent=5 // pred_check_branch
        %105 = sbr.rel (%p102) target = $region12
      $region11: #{r_transform_batch.1} parent=5 // pred_region
        %s106 = ssub.s32 %s14, 1
      $region12: #{r_transform_batch.1} parent=5 // pred_fallthru
        _
      %p107 = scmp.lt.s32.totalorder %s14, 2
      // Predicated region
      $region13: #{r_transform_batch.1} parent=5 // pred_check
        %p108 = pneg %p107
      $region14: #{r_transform_batch.1} parent=5 // pred_check_branch
        %110 = sbr.rel (%p108) target = $region16
      $region15: #{r_transform_batch.1} parent=5 // pred_region
        // Predicated region
        $region17: #{r_transform_batch.1} parent=15 // pred_check
          %p111 = pneg %p34
        $region18: #{r_transform_batch.1} parent=15 // pred_check_branch
          %113 = sbr.rel (%p111) target = $region20
        $region19: #{r_transform_batch.1} parent=15 // pred_region
          %s114 = sand.u32 %s24, 1
          %s115 = scalar_lea.sflag [#allocation3], %s114
          %s116 = sand.u32 %s24, 1
          %s117 = smul.addr %s116, 512
          %s118 = scalar_lea.vmem [#allocation2], %s117
          %120 = vsyncadd %s115, 0
          %s121 = smul.addr %s14, 64
          %s122 = smul.addr %s121, 8
          %s123 = scalar_lea.hbm %s0, %s122
          %s124 = sshll.u32 %s123, 4
          %s125 = int_to_ptr.hbm [resolvable:$true] %s124
          %s126 = sshll.u32 %s118, 4
          %s127 = int_to_ptr.vmem [resolvable:$true] %s126
          %132 = dma.hbm_to_vmem [thread:$0]  %s125, 8192, %s127, %s115, 512, 512, 32
        $region20: #{r_transform_batch.1} parent=15 // pred_fallthru
          _
        // Predicated region
        $region21: #{r_transform_batch.1} parent=15 // pred_check
          %p133 = pneg %p60
        $region22: #{r_transform_batch.1} parent=15 // pred_check_branch
          %135 = sbr.rel (%p133) target = $region24
        $region23: #{r_transform_batch.1} parent=15 // pred_region
          %p136 = scmp.lt.s32.totalorder %s14, 1
          %s137 = scalar_select %p136, %s14, 1
          %s138 = smul.addr %s137, 4
          %s139 = scalar_lea.vmem %s1, %s138
        $region24: #{r_transform_batch.1} parent=15 // pred_fallthru
          _
      $region16: #{r_transform_batch.1} parent=5 // pred_fallthru
        _
      %p140 = scmp.le.s32.totalorder 1, %s14
      %p141 = scmp.lt.s32.totalorder %s14, 3
      %p142 = pnand %p140, %p141
      %p143 = pneg %p142
      // Predicated region
      $region25: #{r_transform_batch.1} parent=5 // pred_check
        _
      $region26: #{r_transform_batch.1} parent=5 // pred_check_branch
        %145 = sbr.rel (%p142) target = $region28
      $region27: #{r_transform_batch.1} parent=5 // pred_region
        %s146 = ssub.s32 %s14, 1
        %s147 = sand.u32 %s27, 1
        %s148 = scalar_lea.sflag [#allocation3], %s147
        %s149 = sand.u32 %s27, 1
        %s150 = smul.addr %s149, 512
        %s151 = scalar_lea.vmem [#allocation2], %s150
        // Predicated region
        $region29: #{r_transform_batch.1} parent=27 // pred_check
          %p152 = pneg %p40
        $region30: #{r_transform_batch.1} parent=27 // pred_check_branch
          %154 = sbr.rel (%p152) target = $region32
        $region31: #{r_transform_batch.1} parent=27 // pred_region
          %156 = dma.done %s148, 8192
        $region32: #{r_transform_batch.1} parent=27 // pred_fallthru
          _
        %s157 = sand.u32 %s27, 1
        %s158 = scalar_lea.sflag [#allocation3], %s157
        %s159 = sand.u32 %s27, 1
        %s160 = smul.addr %s159, 512
        %s161 = scalar_lea.vmem [#allocation2], %s160
        %p162 = pneg %p40
        %p163 = pneg %p37
        %p164 = scmp.lt.s32.totalorder %s19, 1
        %s165 = scalar_select %p164, %s19, 1
        %s166 = smul.addr %s165, 4
        %s167 = scalar_lea.vmem %s1, %s166
        %p168 = pneg %p66
        %p169 = pneg %p63
        %p170 = pneg %p92
        %p171 = pneg %p89
        %s172 = sand.u32 %s79, 1
        %s173 = scalar_lea.sflag [#allocation4], %s172
        %s174 = sand.u32 %s79, 1
        %s175 = scalar_lea.vmem [#allocation5], %s174
        %p176 = scmp.lt.s32.totalorder %s19, 1
        %s177 = scalar_select %p176, %s19, 1
        %s178 = smul.addr %s177, 4
        %s179 = scalar_lea.vmem %s1, %s178
        %v180 = vld [vmem:[%s179] sm:$0xf]
        %v181 = vld [vmem:[%s151] sm:$0xff]
        %v182 = vld [vmem:[%s151 + $0x8] sm:$0xff]
        %v183 = vld [vmem:[%s151 + $0x10] sm:$0xff]
        %v184 = vld [vmem:[%s151 + $0x18] sm:$0xff]
        %v185 = vld [vmem:[%s151 + $0x20] sm:$0xff]
        %v186 = vld [vmem:[%s151 + $0x28] sm:$0xff]
        %v187 = vld [vmem:[%s151 + $0x30] sm:$0xff]
        %v188 = vld [vmem:[%s151 + $0x38] sm:$0xff]
        %v189 = vld [vmem:[%s151 + $0x40] sm:$0xff]
        %v190 = vld [vmem:[%s151 + $0x48] sm:$0xff]
        %v191 = vld [vmem:[%s151 + $0x50] sm:$0xff]
        %v192 = vld [vmem:[%s151 + $0x58] sm:$0xff]
        %v193 = vld [vmem:[%s151 + $0x60] sm:$0xff]
        %v194 = vld [vmem:[%s151 + $0x68] sm:$0xff]
        %v195 = vld [vmem:[%s151 + $0x70] sm:$0xff]
        %v196 = vld [vmem:[%s151 + $0x78] sm:$0xff]
        %v197 = vld [vmem:[%s151 + $0x80] sm:$0xff]
        %v198 = vld [vmem:[%s151 + $0x88] sm:$0xff]
        %v199 = vld [vmem:[%s151 + $0x90] sm:$0xff]
        %v200 = vld [vmem:[%s151 + $0x98] sm:$0xff]
        %v201 = vld [vmem:[%s151 + $0xa0] sm:$0xff]
        %v202 = vld [vmem:[%s151 + $0xa8] sm:$0xff]
        %v203 = vld [vmem:[%s151 + $0xb0] sm:$0xff]
        %v204 = vld [vmem:[%s151 + $0xb8] sm:$0xff]
        %v205 = vld [vmem:[%s151 + $0xc0] sm:$0xff]
        %v206 = vld [vmem:[%s151 + $0xc8] sm:$0xff]
        %v207 = vld [vmem:[%s151 + $0xd0] sm:$0xff]
        %v208 = vld [vmem:[%s151 + $0xd8] sm:$0xff]
        %v209 = vld [vmem:[%s151 + $0xe0] sm:$0xff]
        %v210 = vld [vmem:[%s151 + $0xe8] sm:$0xff]
        %v211 = vld [vmem:[%s151 + $0xf0] sm:$0xff]
        %v212 = vld [vmem:[%s151 + $0xf8] sm:$0xff]
        %v213 = vld [vmem:[%s151 + $0x100] sm:$0xff]
        %v214 = vld [vmem:[%s151 + $0x108] sm:$0xff]
        %v215 = vld [vmem:[%s151 + $0x110] sm:$0xff]
        %v216 = vld [vmem:[%s151 + $0x118] sm:$0xff]
        %v217 = vld [vmem:[%s151 + $0x120] sm:$0xff]
        %v218 = vld [vmem:[%s151 + $0x128] sm:$0xff]
        %v219 = vld [vmem:[%s151 + $0x130] sm:$0xff]
        %v220 = vld [vmem:[%s151 + $0x138] sm:$0xff]
        %v221 = vld [vmem:[%s151 + $0x140] sm:$0xff]
        %v222 = vld [vmem:[%s151 + $0x148] sm:$0xff]
        %v223 = vld [vmem:[%s151 + $0x150] sm:$0xff]
        %v224 = vld [vmem:[%s151 + $0x158] sm:$0xff]
        %v225 = vld [vmem:[%s151 + $0x160] sm:$0xff]
        %v226 = vld [vmem:[%s151 + $0x168] sm:$0xff]
        %v227 = vld [vmem:[%s151 + $0x170] sm:$0xff]
        %v228 = vld [vmem:[%s151 + $0x178] sm:$0xff]
        %v229 = vld [vmem:[%s151 + $0x180] sm:$0xff]
        %v230 = vld [vmem:[%s151 + $0x188] sm:$0xff]
        %v231 = vld [vmem:[%s151 + $0x190] sm:$0xff]
        %v232 = vld [vmem:[%s151 + $0x198] sm:$0xff]
        %v233 = vld [vmem:[%s151 + $0x1a0] sm:$0xff]
        %v234 = vld [vmem:[%s151 + $0x1a8] sm:$0xff]
        %v235 = vld [vmem:[%s151 + $0x1b0] sm:$0xff]
        %v236 = vld [vmem:[%s151 + $0x1b8] sm:$0xff]
        %v237 = vld [vmem:[%s151 + $0x1c0] sm:$0xff]
        %v238 = vld [vmem:[%s151 + $0x1c8] sm:$0xff]
        %v239 = vld [vmem:[%s151 + $0x1d0] sm:$0xff]
        %v240 = vld [vmem:[%s151 + $0x1d8] sm:$0xff]
        %v241 = vld [vmem:[%s151 + $0x1e0] sm:$0xff]
        %v242 = vld [vmem:[%s151 + $0x1e8] sm:$0xff]
        %v243 = vld [vmem:[%s151 + $0x1f0] sm:$0xff]
        %v244 = vld [vmem:[%s151 + $0x1f8] sm:$0xff]
        %v246 = vperm.slane %v180, 0
        %v247 = vperm.slane %v180, 1
        %v248 = vperm.slane %v180, 2
        %v249 = vperm.slane %v180, 3
        %254 = vmatpush.xpose.msra.mxu0 %v241
        %255 = vmatpush.xpose.msra.mxu0 %v237
        %256 = vmatpush.xpose.msra.mxu0 %v233
        %257 = vmatpush.xpose.msra.mxu0 %v229
        %258 = vmatpush.xpose.msra.mxu0 %v225
        %259 = vmatpush.xpose.msra.mxu0 %v221
        %260 = vmatpush.xpose.msra.mxu0 %v217
        %261 = vmatpush.xpose.msra.mxu0 %v213
        %262 = vmatpush.xpose.msra.mxu0 %v209
        %263 = vmatpush.xpose.msra.mxu0 %v205
        %264 = vmatpush.xpose.msra.mxu0 %v201
        %265 = vmatpush.xpose.msra.mxu0 %v197
        %266 = vmatpush.xpose.msra.mxu0 %v193
        %267 = vmatpush.xpose.msra.mxu0 %v189
        %268 = vmatpush.xpose.msra.mxu0 %v185
        %269 = vmatpush.xpose.msra.mxu0 %v181
        %270 = vmatmul.f32.gmra.mxu0 %v246
        %v271 = vpop.f32.mrf.mxu0
        %v272 = vadd.f32 0.0, %v271
        %273 = vdwg.mxu0
        %274 = vmatpush.xpose.msra.mxu0 %v242
        %275 = vmatpush.xpose.msra.mxu0 %v238
        %276 = vmatpush.xpose.msra.mxu0 %v234
        %277 = vmatpush.xpose.msra.mxu0 %v230
        %278 = vmatpush.xpose.msra.mxu0 %v226
        %279 = vmatpush.xpose.msra.mxu0 %v222
        %280 = vmatpush.xpose.msra.mxu0 %v218
        %281 = vmatpush.xpose.msra.mxu0 %v214
        %282 = vmatpush.xpose.msra.mxu0 %v210
        %283 = vmatpush.xpose.msra.mxu0 %v206
        %284 = vmatpush.xpose.msra.mxu0 %v202
        %285 = vmatpush.xpose.msra.mxu0 %v198
        %286 = vmatpush.xpose.msra.mxu0 %v194
        %287 = vmatpush.xpose.msra.mxu0 %v190
        %288 = vmatpush.xpose.msra.mxu0 %v186
        %289 = vmatpush.xpose.msra.mxu0 %v182
        %290 = vmatmul.f32.gmra.mxu0 %v247
        %v291 = vpop.f32.mrf.mxu0
        %v292 = vadd.f32 %v272, %v291
        %293 = vdwg.mxu0
        %294 = vmatpush.xpose.msra.mxu0 %v243
        %295 = vmatpush.xpose.msra.mxu0 %v239
        %296 = vmatpush.xpose.msra.mxu0 %v235
        %297 = vmatpush.xpose.msra.mxu0 %v231
        %298 = vmatpush.xpose.msra.mxu0 %v227
        %299 = vmatpush.xpose.msra.mxu0 %v223
        %300 = vmatpush.xpose.msra.mxu0 %v219
        %301 = vmatpush.xpose.msra.mxu0 %v215
        %302 = vmatpush.xpose.msra.mxu0 %v211
        %303 = vmatpush.xpose.msra.mxu0 %v207
        %304 = vmatpush.xpose.msra.mxu0 %v203
        %305 = vmatpush.xpose.msra.mxu0 %v199
        %306 = vmatpush.xpose.msra.mxu0 %v195
        %307 = vmatpush.xpose.msra.mxu0 %v191
        %308 = vmatpush.xpose.msra.mxu0 %v187
        %309 = vmatpush.xpose.msra.mxu0 %v183
        %310 = vmatmul.f32.gmra.mxu0 %v248
        %v311 = vpop.f32.mrf.mxu0
        %v312 = vadd.f32 %v292, %v311
        %313 = vdwg.mxu0
        %314 = vmatpush.xpose.msra.mxu0 %v244
        %315 = vmatpush.xpose.msra.mxu0 %v240
        %316 = vmatpush.xpose.msra.mxu0 %v236
        %317 = vmatpush.xpose.msra.mxu0 %v232
        %318 = vmatpush.xpose.msra.mxu0 %v228
        %319 = vmatpush.xpose.msra.mxu0 %v224
        %320 = vmatpush.xpose.msra.mxu0 %v220
        %321 = vmatpush.xpose.msra.mxu0 %v216
        %322 = vmatpush.xpose.msra.mxu0 %v212
        %323 = vmatpush.xpose.msra.mxu0 %v208
        %324 = vmatpush.xpose.msra.mxu0 %v204
        %325 = vmatpush.xpose.msra.mxu0 %v200
        %326 = vmatpush.xpose.msra.mxu0 %v196
        %327 = vmatpush.xpose.msra.mxu0 %v192
        %328 = vmatpush.xpose.msra.mxu0 %v188
        %329 = vmatpush.xpose.msra.mxu0 %v184
        %330 = vmatmul.f32.gmra.mxu0 %v249
        %v331 = vpop.f32.mrf.mxu0
        %v332 = vadd.f32 %v312, %v331
        %333 = vdwg.mxu0
        %334 = vst [vmem:[%s175] sm:$0x1] %v332
        %s335 = sand.u32 %s79, 1
        %s336 = scalar_lea.sflag [#allocation4], %s335
        %s337 = sand.u32 %s79, 1
        %s338 = scalar_lea.vmem [#allocation5], %s337
        // Predicated region
        $region33: #{r_transform_batch.1} parent=27 // pred_check
          %p339 = pneg %p89
        $region34: #{r_transform_batch.1} parent=27 // pred_check_branch
          %341 = sbr.rel (%p339) target = $region36
        $region35: #{r_transform_batch.1} parent=27 // pred_region
          %343 = vsyncadd %s336, 0
          %s344 = scalar_lea.hbm %s2, %s19
          %s346 = sshll.u32 %s338, 4
          %s347 = int_to_ptr.vmem [resolvable:$true] %s346
          %s348 = sshll.u32 %s344, 4
          %s349 = int_to_ptr.hbm [resolvable:$true] %s348
          %351 = dma.vmem_to_hbm [thread:$0]  %s347, 16, %s349, %s336
        $region36: #{r_transform_batch.1} parent=27 // pred_fallthru
          _
      $region28: #{r_transform_batch.1} parent=5 // pred_fallthru
        _
      %p352 = scmp.le.s32.totalorder 2, %s14
      // Predicated region
      $region37: #{r_transform_batch.1} parent=5 // pred_check
        %p353 = pneg %p352
      $region38: #{r_transform_batch.1} parent=5 // pred_check_branch
        %355 = sbr.rel (%p353) target = $region40
      $region39: #{r_transform_batch.1} parent=5 // pred_region
        %s356 = ssub.s32 %s14, 2
        // Predicated region
        $region41: #{r_transform_batch.1} parent=39 // pred_check
          %p357 = pneg %p95
        $region42: #{r_transform_batch.1} parent=39 // pred_check_branch
          %359 = sbr.rel (%p357) target = $region44
        $region43: #{r_transform_batch.1} parent=39 // pred_region
          %s360 = sand.u32 %s80, 1
          %s361 = scalar_lea.sflag [#allocation4], %s360
          %s362 = sand.u32 %s80, 1
          %s363 = scalar_lea.vmem [#allocation5], %s362
          %365 = dma.done %s361, 16
        $region44: #{r_transform_batch.1} parent=39 // pred_fallthru
          _
      $region40: #{r_transform_batch.1} parent=5 // pred_fallthru
        _
    $region6: #{r_transform_batch.1} parent=1 // loop_footer
      %s18 = sadd.s32 1, %s14
    $region7: #{r_transform_batch.1} parent=1 // loop_footer_branch
      %13 = sbr.rel target = $region3
    $region8: #{r_transform_batch.1} parent=1 // loop_exit
      _
    %366 = vsyncpa [#allocation3], 1
    %s367 = scalar_lea.sflag [#allocation3], 1
    %368 = vsyncpa %s367, 1
    %369 = vsyncpa [#allocation4], 1
    %s370 = scalar_lea.sflag [#allocation4], 1
    %371 = vsyncpa %s370, 1

</llo_original>
